<compile_context>
chip_gen: v6e
topology: v6e:2x2x1
jax: 0.10.0
libtpu: 0.0.40
codegen_flags: <defaults>
</compile_context>

<pallas_src>
import functools

import jax
import jax.numpy as jnp
from jax import lax
from jax.experimental import pallas as pl
from jax.experimental.pallas import tpu as pltpu

NUM_CLASSES = 19
IGNORE_INDEX = -1
ALPHA = 0.5
BETA = 1.0

MAX_TILE_HW = 16384   # pixels per grid step (multiple of 128); safe for v5e VMEM


def _round_up(a, b):
    return (a + b - 1) // b * b


def _ib_stats_kernel(x_ref, t_ref, ce_ref, cnt_ref, *, ignore_index, num_classes):
    """Accumulate lane-dense per-class CE sums and per-class valid counts.

    x_ref   : (1, C, T) logits block (classes on sublanes, pixels on lanes)
    t_ref   : (1, 1, T) int32 labels block
    ce_ref  : (1, 1, C, 128) f32 accumulator (resident across reduction axis)
    cnt_ref : (1, 1, C, 128) f32 accumulator
    """
    j = pl.program_id(2)

    @pl.when(j == 0)
    def _():
        ce_ref[...] = jnp.zeros_like(ce_ref)
        cnt_ref[...] = jnp.zeros_like(cnt_ref)

    x = x_ref[...].astype(jnp.float32)          # (1, C, T)
    t = t_ref[...]                              # (1, 1, T)
    c, tlen = x.shape[1], x.shape[2]

    # numerically stable log-sum-exp over the class (sublane) axis
    m = jnp.max(x, axis=1, keepdims=True)                              # (1, 1, T)
    lse = m + jnp.log(jnp.sum(jnp.exp(x - m), axis=1, keepdims=True))  # (1, 1, T)

    # match[c, p] = (t_p == c) [and valid]; class ids live on sublanes only
    class_ids = lax.broadcasted_iota(jnp.int32, (1, c, 1), 1)          # (1, C, 1)
    match = class_ids == t                                             # (1, C, T)
    if 0 <= ignore_index < num_classes:
        # only needed if ignore_index collides with a real class id
        match = jnp.logical_and(match, t != ignore_index)

    # CE contribution with the target-logit gather folded in; pure selects
    ce_sel = jnp.where(match, lse - x, 0.0)                            # (1, C, T)
    cnt_sel = jnp.where(match, 1.0, 0.0)                               # (1, C, T)

    # lane-dense partial sums: plain VPU vreg adds over 128-wide lane groups
    ce_acc = jnp.zeros((1, c, 128), jnp.float32)
    cnt_acc = jnp.zeros((1, c, 128), jnp.float32)
    for k in range(tlen // 128):                # static, 128-aligned slices
        sl = slice(k * 128, (k + 1) * 128)
        ce_acc = ce_acc + ce_sel[:, :, sl]
        cnt_acc = cnt_acc + cnt_sel[:, :, sl]

    ce_ref[...] += ce_acc.reshape(ce_ref.shape)
    cnt_ref[...] += cnt_acc.reshape(cnt_ref.shape)


def influence_balanced_loss(inputs, targets, *, num_classes=NUM_CLASSES,
                            ignore_index=IGNORE_INDEX, reduction="mean",
                            alpha=ALPHA, beta=BETA, max_tile_hw=MAX_TILE_HW):
    n, c, h, w = inputs.shape
    assert c == num_classes
    hw = h * w

    hw128 = _round_up(hw, 128)
    tile = min(_round_up(max_tile_hw, 128), hw128)

    # v7x megacore: with a single image the batch axis can't be sharded across
    # the two TensorCores, so split the pixel range instead (no-op for N >= 2).
    n_split = 2 if n == 1 else 1
    hw_pad = _round_up(hw, n_split * tile)
    steps = hw_pad // (n_split * tile)

    # Free reshape of contiguous NCHW -> (N, C, HW); keep input dtype in HBM
    # (pass bf16 logits upstream on v5e to halve HBM traffic).
    x = inputs.reshape(n, c, hw)
    t = targets.reshape(n, 1, hw).astype(jnp.int32)
    if hw_pad != hw:
        x = jnp.pad(x, ((0, 0), (0, 0), (0, hw_pad - hw)))
        t = jnp.pad(t, ((0, 0), (0, 0), (0, hw_pad - hw)),
                    constant_values=ignore_index)

    grid = (n, n_split, steps)
    kernel = functools.partial(_ib_stats_kernel, ignore_index=ignore_index,
                               num_classes=num_classes)

    def in_map(i, s, j):
        return (i, 0, s * steps + j)

    def out_map(i, s, j):
        return (i, s, 0, 0)

    ce_parts, cnt_parts = pl.pallas_call(
        kernel,
        out_shape=(
            jax.ShapeDtypeStruct((n, n_split, c, 128), jnp.float32),
            jax.ShapeDtypeStruct((n, n_split, c, 128), jnp.float32),
        ),
        grid_spec=pltpu.PrefetchScalarGridSpec(
            num_scalar_prefetch=0,
            grid=grid,
            in_specs=[
                pl.BlockSpec((1, c, tile), in_map),
                pl.BlockSpec((1, 1, tile), in_map),
            ],
            out_specs=[
                pl.BlockSpec((1, 1, c, 128), out_map),
                pl.BlockSpec((1, 1, c, 128), out_map),
            ],
        ),
        compiler_params=pltpu.CompilerParams(
            dimension_semantics=("parallel", "parallel", "arbitrary"),
            vmem_limit_bytes=32 * 1024 * 1024),
    )(x, t)

    # Tiny per-class finish in the wrapper (19 scalars).
    ce_c = jnp.sum(ce_parts, axis=(0, 1, 3))       # (C,) f32
    cnt_c = jnp.sum(cnt_parts, axis=(0, 1, 3))     # (C,) f32, exact (<< 2^24)
    total = jnp.sum(cnt_c)

    influence = cnt_c / total
    influence = jnp.maximum(influence, beta)       # torch.clamp(min=beta)
    w_c = alpha / (influence + beta)               # per-class weight
    loss_sum = jnp.sum(w_c * ce_c)                 # == sum_p w[t_p] * ce_p

    if reduction == "mean":
        return loss_sum / total
    elif reduction == "sum":
        return loss_sum
    else:
        # TODO(synk): reduction='none' needs the dynamically-shaped masked
        # per-pixel vector (inputs[valid_mask]); not expressible as a static
        # Pallas output.
        raise NotImplementedError("reduction='none' not supported in the Pallas port")


def _reference(inputs, targets, *, ignore_index=IGNORE_INDEX, alpha=ALPHA, beta=BETA):
    """Pure-JAX reference mirroring the PyTorch forward (for validation)."""
    c = inputs.shape[1]
    x = jnp.transpose(inputs, (0, 2, 3, 1)).reshape(-1, c).astype(jnp.float32)
    t = targets.reshape(-1).astype(jnp.int32)
    valid = t != ignore_index
    validf = valid.astype(jnp.float32)
    tsafe = jnp.where(valid, t, 0)
    counts = jnp.sum(jax.nn.one_hot(tsafe, c, dtype=jnp.float32) * validf[:, None], axis=0)
    infl = jnp.maximum(counts / jnp.sum(counts), beta)
    lse = jax.scipy.special.logsumexp(x, axis=-1)
    ce = lse - jnp.take_along_axis(x, tsafe[:, None], axis=-1)[:, 0]
    wgt = alpha / (infl[tsafe] + beta)
    wl = wgt * ce * validf
    return jnp.sum(wl) / jnp.sum(validf)


if __name__ == "__main__":
    key = jax.random.PRNGKey(0)
    k1, k2, k3, k4 = jax.random.split(key, 4)

    # Case 1: batch=2 (batch-parallel grid path).
    N, C, H, W = 2, NUM_CLASSES, 16, 16
    logits = jax.random.normal(k1, (N, C, H, W), dtype=jnp.float32)
    labels = jax.random.randint(k2, (N, H, W), -1, NUM_CLASSES)  # includes ignore_index
    out = jax.block_until_ready(influence_balanced_loss(logits, labels, reduction="mean"))
    ref = jax.block_until_ready(_reference(logits, labels))
    assert jnp.allclose(out, ref, atol=1e-4, rtol=1e-4), (out, ref)

    # Case 2: batch=1 exercises the pixel-split (v7x megacore) grid path + padding.
    logits1 = jax.random.normal(k3, (1, NUM_CLASSES, 16, 24), dtype=jnp.float32)
    labels1 = jax.random.randint(k4, (1, 16, 24), -1, NUM_CLASSES)
    out1 = jax.block_until_ready(influence_balanced_loss(logits1, labels1, reduction="mean"))
    ref1 = jax.block_until_ready(_reference(logits1, labels1))
    assert jnp.allclose(out1, ref1, atol=1e-4, rtol=1e-4), (out1, ref1)

    print("KERNEL_OK")
</pallas_src>

<mosaic_0001>
module attributes {stable_mosaic.version = 11 : i64} {
  func.func @_ib_stats_kernel(%arg0: i32, %arg1: i32, %arg2: i32, %arg3: memref<1x19x256xf32, #tpu.memory_space<vmem>>, %arg4: memref<1x1x256xi32, #tpu.memory_space<vmem>>, %arg5: memref<1x1x19x128xf32, #tpu.memory_space<vmem>>, %arg6: memref<1x1x19x128xf32, #tpu.memory_space<vmem>>) attributes {dimension_semantics = [#tpu.dimension_semantics<parallel>, #tpu.dimension_semantics<parallel>, #tpu.dimension_semantics<arbitrary>], iteration_bounds = array<i64: 2, 1, 1>, scalar_prefetch = 0 : i64, scratch_operands = 0 : i64, tpu.core_type = #tpu.core_type<tc>, window_params = [{transform_indices = @transform_0, window_bounds = array<i64: 1, 19, 256>}, {transform_indices = @transform_1, window_bounds = array<i64: 1, 1, 256>}, {transform_indices = @transform_2, window_bounds = array<i64: 1, 1, 19, 128>}, {transform_indices = @transform_3, window_bounds = array<i64: 1, 1, 19, 128>}]} {
    %c0_i32 = arith.constant 0 : i32
    %0 = arith.cmpi eq, %arg2, %c0_i32 : i32
    %1 = arith.extui %0 : i1 to i32
    %c0_i32_0 = arith.constant 0 : i32
    %2 = arith.cmpi ne, %1, %c0_i32_0 : i32
    scf.if %2 {
      %cst_28 = arith.constant 0.000000e+00 : f32
      %43 = vector.broadcast %cst_28 : f32 to vector<1x1x19x128xf32>
      %c0_29 = arith.constant 0 : index
      %c0_30 = arith.constant 0 : index
      %c0_31 = arith.constant 0 : index
      %c0_32 = arith.constant 0 : index
      %44 = vector.load %arg5[%c0_29, %c0_30, %c0_31, %c0_32] : memref<1x1x19x128xf32, #tpu.memory_space<vmem>>, vector<1x1x19x128xf32>
      tpu.vector_store %arg5[%c0_29, %c0_30, %c0_31, %c0_32], %43 {strides = array<i32>} : memref<1x1x19x128xf32, #tpu.memory_space<vmem>>, vector<1x1x19x128xf32>,
      %cst_33 = arith.constant 0.000000e+00 : f32
      %45 = vector.broadcast %cst_33 : f32 to vector<1x1x19x128xf32>
      %c0_34 = arith.constant 0 : index
      %c0_35 = arith.constant 0 : index
      %c0_36 = arith.constant 0 : index
      %c0_37 = arith.constant 0 : index
      %46 = vector.load %arg6[%c0_34, %c0_35, %c0_36, %c0_37] : memref<1x1x19x128xf32, #tpu.memory_space<vmem>>, vector<1x1x19x128xf32>
      tpu.vector_store %arg6[%c0_34, %c0_35, %c0_36, %c0_37], %45 {strides = array<i32>} : memref<1x1x19x128xf32, #tpu.memory_space<vmem>>, vector<1x1x19x128xf32>,
    } else {
    }
    %c0 = arith.constant 0 : index
    %c0_1 = arith.constant 0 : index
    %c0_2 = arith.constant 0 : index
    %3 = vector.load %arg3[%c0, %c0_1, %c0_2] : memref<1x19x256xf32, #tpu.memory_space<vmem>>, vector<1x19x256xf32>
    %c0_3 = arith.constant 0 : index
    %c0_4 = arith.constant 0 : index
    %c0_5 = arith.constant 0 : index
    %4 = vector.load %arg4[%c0_3, %c0_4, %c0_5] : memref<1x1x256xi32, #tpu.memory_space<vmem>>, vector<1x1x256xi32>
    %cst = arith.constant dense<0xFF800000> : vector<1x256xf32>
    %5 = vector.multi_reduction <maximumf>, %3, %cst [1] : vector<1x19x256xf32> to vector<1x256xf32>
    %6 = vector.shape_cast %5 : vector<1x256xf32> to vector<1x1x256xf32>
    %7 = vector.broadcast %6 : vector<1x1x256xf32> to vector<1x19x256xf32>
    %8 = arith.subf %3, %7 : vector<1x19x256xf32>
    %9 = math.exp %8 : vector<1x19x256xf32>
    %cst_6 = arith.constant dense<0.000000e+00> : vector<1x256xf32>
    %10 = vector.multi_reduction <add>, %9, %cst_6 [1] : vector<1x19x256xf32> to vector<1x256xf32>
    %11 = vector.shape_cast %10 : vector<1x256xf32> to vector<1x1x256xf32>
    %12 = math.log %11 : vector<1x1x256xf32>
    %13 = arith.addf %6, %12 : vector<1x1x256xf32>
    %14 = tpu.iota {dimensions = array<i32: 1>} : vector<1x19x1xi32>
    %15 = vector.broadcast %14 : vector<1x19x1xi32> to vector<1x19x256xi32>
    %16 = vector.broadcast %4 : vector<1x1x256xi32> to vector<1x19x256xi32>
    %17 = arith.cmpi eq, %15, %16 : vector<1x19x256xi32>
    %18 = vector.broadcast %13 : vector<1x1x256xf32> to vector<1x19x256xf32>
    %19 = arith.subf %18, %3 : vector<1x19x256xf32>
    %cst_7 = arith.constant 0.000000e+00 : f32
    %20 = vector.broadcast %cst_7 : f32 to vector<1x19x256xf32>
    %21 = arith.select %17, %19, %20 : vector<1x19x256xi1>, vector<1x19x256xf32>
    %cst_8 = arith.constant 1.000000e+00 : f32
    %cst_9 = arith.constant 0.000000e+00 : f32
    %22 = vector.broadcast %cst_8 : f32 to vector<1x19x256xf32>
    %23 = vector.broadcast %cst_9 : f32 to vector<1x19x256xf32>
    %24 = arith.select %17, %22, %23 : vector<1x19x256xi1>, vector<1x19x256xf32>
    %cst_10 = arith.constant 0.000000e+00 : f32
    %25 = vector.broadcast %cst_10 : f32 to vector<1x19x128xf32>
    %cst_11 = arith.constant 0.000000e+00 : f32
    %26 = vector.broadcast %cst_11 : f32 to vector<1x19x128xf32>
    %27 = vector.extract_strided_slice %21 {offsets = [0, 0, 0], sizes = [1, 19, 128], strides = [1, 1, 1]} : vector<1x19x256xf32> to vector<1x19x128xf32>
    %28 = arith.addf %25, %27 : vector<1x19x128xf32>
    %29 = vector.extract_strided_slice %24 {offsets = [0, 0, 0], sizes = [1, 19, 128], strides = [1, 1, 1]} : vector<1x19x256xf32> to vector<1x19x128xf32>
    %30 = arith.addf %26, %29 : vector<1x19x128xf32>
    %31 = vector.extract_strided_slice %21 {offsets = [0, 0, 128], sizes = [1, 19, 128], strides = [1, 1, 1]} : vector<1x19x256xf32> to vector<1x19x128xf32>
    %32 = arith.addf %28, %31 : vector<1x19x128xf32>
    %33 = vector.extract_strided_slice %24 {offsets = [0, 0, 128], sizes = [1, 19, 128], strides = [1, 1, 1]} : vector<1x19x256xf32> to vector<1x19x128xf32>
    %34 = arith.addf %30, %33 : vector<1x19x128xf32>
    %c0_12 = arith.constant 0 : index
    %c0_13 = arith.constant 0 : index
    %c0_14 = arith.constant 0 : index
    %c0_15 = arith.constant 0 : index
    %35 = vector.load %arg5[%c0_12, %c0_13, %c0_14, %c0_15] : memref<1x1x19x128xf32, #tpu.memory_space<vmem>>, vector<1x1x19x128xf32>
    %36 = vector.shape_cast %32 : vector<1x19x128xf32> to vector<1x1x19x128xf32>
    %37 = arith.addf %35, %36 : vector<1x1x19x128xf32>
    %c0_16 = arith.constant 0 : index
    %c0_17 = arith.constant 0 : index
    %c0_18 = arith.constant 0 : index
    %c0_19 = arith.constant 0 : index
    %38 = vector.load %arg5[%c0_16, %c0_17, %c0_18, %c0_19] : memref<1x1x19x128xf32, #tpu.memory_space<vmem>>, vector<1x1x19x128xf32>
    tpu.vector_store %arg5[%c0_16, %c0_17, %c0_18, %c0_19], %37 {strides = array<i32>} : memref<1x1x19x128xf32, #tpu.memory_space<vmem>>, vector<1x1x19x128xf32>,
    %c0_20 = arith.constant 0 : index
    %c0_21 = arith.constant 0 : index
    %c0_22 = arith.constant 0 : index
    %c0_23 = arith.constant 0 : index
    %39 = vector.load %arg6[%c0_20, %c0_21, %c0_22, %c0_23] : memref<1x1x19x128xf32, #tpu.memory_space<vmem>>, vector<1x1x19x128xf32>
    %40 = vector.shape_cast %34 : vector<1x19x128xf32> to vector<1x1x19x128xf32>
    %41 = arith.addf %39, %40 : vector<1x1x19x128xf32>
    %c0_24 = arith.constant 0 : index
    %c0_25 = arith.constant 0 : index
    %c0_26 = arith.constant 0 : index
    %c0_27 = arith.constant 0 : index
    %42 = vector.load %arg6[%c0_24, %c0_25, %c0_26, %c0_27] : memref<1x1x19x128xf32, #tpu.memory_space<vmem>>, vector<1x1x19x128xf32>
    tpu.vector_store %arg6[%c0_24, %c0_25, %c0_26, %c0_27], %41 {strides = array<i32>} : memref<1x1x19x128xf32, #tpu.memory_space<vmem>>, vector<1x1x19x128xf32>,
    return
  }
  func.func @transform_0(%arg0: i32, %arg1: i32, %arg2: i32) -> (i32, i32, i32) {
    %c1_i32 = arith.constant 1 : i32
    %0 = arith.muli %arg1, %c1_i32 : i32
    %1 = arith.addi %0, %arg2 : i32
    %c0_i32 = arith.constant 0 : i32
    %c0_i32_0 = arith.constant 0 : i32
    return %arg0, %c0_i32, %1 : i32, i32, i32
  }
  func.func @transform_1(%arg0: i32, %arg1: i32, %arg2: i32) -> (i32, i32, i32) {
    %c1_i32 = arith.constant 1 : i32
    %0 = arith.muli %arg1, %c1_i32 : i32
    %1 = arith.addi %0, %arg2 : i32
    %c0_i32 = arith.constant 0 : i32
    %c0_i32_0 = arith.constant 0 : i32
    return %arg0, %c0_i32, %1 : i32, i32, i32
  }
  func.func @transform_2(%arg0: i32, %arg1: i32, %arg2: i32) -> (i32, i32, i32, i32) {
    %c0_i32 = arith.constant 0 : i32
    %c0_i32_0 = arith.constant 0 : i32
    %c0_i32_1 = arith.constant 0 : i32
    return %arg0, %arg1, %c0_i32, %c0_i32_0 : i32, i32, i32, i32
  }
  func.func @transform_3(%arg0: i32, %arg1: i32, %arg2: i32) -> (i32, i32, i32, i32) {
    %c0_i32 = arith.constant 0 : i32
    %c0_i32_0 = arith.constant 0 : i32
    %c0_i32_1 = arith.constant 0 : i32
    return %arg0, %arg1, %c0_i32, %c0_i32_0 : i32, i32, i32, i32
  }
}

</mosaic_0001>

<llo_original>
// kernel: tpu_custom_call.1
$region0: #{tpu_custom_call.1}
  #allocation0 [shape = 'u32[]', space=smem, size = 0x4, offset = 0x4, fixed_abs, tag = 'smem constant byte address 0x4 - core index']
  #allocation1 [shape = 'u32[144,128]{1,0:T(1,128)}', space=vmem, size = 0x12000, scoped, tag = 'internal scratch']
  %s0 = inlined_call_operand.vmem [shape: f32[2,19,256], index: 0, kind: input, shape index: {}]
  %s1 = inlined_call_operand.vmem [shape: s32[2,1,256], index: 1, kind: input, shape index: {}]
  %s2 = inlined_call_operand.vmem [shape: f32[2,1,19,128], index: 2, kind: output, shape index: {0}]
  %s3 = inlined_call_operand.vmem [shape: f32[2,1,19,128], index: 3, kind: output, shape index: {1}]
  %4 = xla_tuple %s2, %s3
  %s5 = sld [smem:[#allocation0]]
  $region53: #{tpu_custom_call.1} parent=0
    _
  %s7 = ssub.s32 1, %s5
  %s8 = scalar_select 0, %s7, %s5
  loop: start=0, step=1, limit=4
  $region2: #{tpu_custom_call.1} parent=0 // loop_pre_header
    _
  $region3: #{tpu_custom_call.1} parent=0 // loop_header
    %s10 = sphi 0, %s14
    %p11 = scmp.ge.s32.totalorder %s10, 4
    %s17 = sphi 0, %s36
    %s18 = sphi 0, %s32
    %s19 = sphi 0, %s28
    %s20 = sphi 0, %s17
    %s21 = sphi 0, %s18
    %s22 = sphi 0, %s19
    %s23 = sphi 0, %s20
    %s24 = sphi 0, %s21
    %s25 = sphi 0, %s22
    %s43 = sphi 0, %s45
    %s46 = sphi 0, %s43
    %s47 = sphi 0, %s46
    %s63 = sphi 0, %s47
    %s73 = sphi 0, %s75
    %s76 = sphi 0, %s73
    %s77 = sphi 0, %s76
    %s93 = sphi 0, %s77
    %s101 = sphi 0, %s103
    %s104 = sphi 0, %s101
    %s105 = sphi 0, %s104
    %s121 = sphi 0, %s105
    %s129 = sphi 0, %s131
    %s132 = sphi 0, %s129
    %s133 = sphi 0, %s132
    %s149 = sphi 0, %s133
  $region4: #{tpu_custom_call.1} parent=0 // loop_header_branch
    %13 = sbr.rel (%p11) target = $region8
  $region5: #{tpu_custom_call.1} parent=0 // loop_body
    %s15 = ssub.s32 %s10, 1
    %s16 = ssub.s32 %s10, 2
    %s26 = sadd.s32 1, %s19
    %p27 = scmp.ge.s32.totalorder %s26, 1
    %s28 = scalar_select %p27, 0, %s26
    %s29 = sadd.s32 1, %s18
    %s30 = scalar_select %p27, %s29, %s18
    %p31 = scmp.ge.s32.totalorder %s30, 1
    %s32 = scalar_select %p31, 0, %s30
    %s33 = sadd.s32 1, %s17
    %s34 = scalar_select %p31, %s33, %s17
    %p35 = scmp.ge.s32.totalorder %s34, 2
    %s36 = scalar_select %p35, 0, %s34
    %s37 = sadd.s32 %s18, %s19
    %s38 = sadd.s32 %s32, %s28
    %s39 = ssub.s32 %s17, %s36
    %s40 = ssub.s32 %s37, %s38
    %s41 = sor.u32 %s39, %s40
    %p42 = scmp.eq.s32.totalorder %s41, 0
    %s44 = sadd.s32 %s43, 1
    %s45 = scalar_select %p42, %s43, %s44
    %p48 = pneg %p42
    %p49 = scmp.eq.s32.totalorder %s10, 1
    %p50 = por %p48, %p49
    %p51 = scmp.ne.s32.totalorder %s43, %s46
    %p52 = scmp.eq.s32.totalorder %s10, 0
    %p53 = por %p51, %p52
    %p54 = scmp.ne.s32.totalorder %s43, %s46
    %p55 = scmp.eq.s32.totalorder %s15, 1
    %p56 = por %p54, %p55
    %p57 = scmp.ne.s32.totalorder %s46, %s47
    %p58 = scmp.eq.s32.totalorder %s15, 0
    %p59 = por %p57, %p58
    %p60 = scmp.ne.s32.totalorder %s46, %s47
    %p61 = scmp.eq.s32.totalorder %s16, 1
    %p62 = por %p60, %p61
    %p64 = scmp.ne.s32.totalorder %s47, %s63
    %p65 = scmp.eq.s32.totalorder %s16, 0
    %p66 = por %p64, %p65
    %s67 = sadd.s32 %s18, %s19
    %s68 = sadd.s32 %s32, %s28
    %s69 = ssub.s32 %s17, %s36
    %s70 = ssub.s32 %s67, %s68
    %s71 = sor.u32 %s69, %s70
    %p72 = scmp.eq.s32.totalorder %s71, 0
    %s74 = sadd.s32 %s73, 1
    %s75 = scalar_select %p72, %s73, %s74
    %p78 = pneg %p72
    %p79 = scmp.eq.s32.totalorder %s10, 1
    %p80 = por %p78, %p79
    %p81 = scmp.ne.s32.totalorder %s73, %s76
    %p82 = scmp.eq.s32.totalorder %s10, 0
    %p83 = por %p81, %p82
    %p84 = scmp.ne.s32.totalorder %s73, %s76
    %p85 = scmp.eq.s32.totalorder %s15, 1
    %p86 = por %p84, %p85
    %p87 = scmp.ne.s32.totalorder %s76, %s77
    %p88 = scmp.eq.s32.totalorder %s15, 0
    %p89 = por %p87, %p88
    %p90 = scmp.ne.s32.totalorder %s76, %s77
    %p91 = scmp.eq.s32.totalorder %s16, 1
    %p92 = por %p90, %p91
    %p94 = scmp.ne.s32.totalorder %s77, %s93
    %p95 = scmp.eq.s32.totalorder %s16, 0
    %p96 = por %p94, %p95
    %s97 = ssub.s32 %s17, %s36
    %s98 = ssub.s32 %s18, %s32
    %s99 = sor.u32 %s97, %s98
    %p100 = scmp.eq.s32.totalorder %s99, 0
    %s102 = sadd.s32 %s101, 1
    %s103 = scalar_select %p100, %s101, %s102
    %p106 = pneg %p100
    %p107 = scmp.eq.s32.totalorder %s10, 1
    %p108 = por %p106, %p107
    %p109 = scmp.ne.s32.totalorder %s101, %s104
    %p110 = scmp.eq.s32.totalorder %s10, 0
    %p111 = por %p109, %p110
    %p112 = scmp.ne.s32.totalorder %s101, %s104
    %p113 = scmp.eq.s32.totalorder %s15, 1
    %p114 = por %p112, %p113
    %p115 = scmp.ne.s32.totalorder %s104, %s105
    %p116 = scmp.eq.s32.totalorder %s15, 0
    %p117 = por %p115, %p116
    %p118 = scmp.ne.s32.totalorder %s104, %s105
    %p119 = scmp.eq.s32.totalorder %s16, 1
    %p120 = por %p118, %p119
    %p122 = scmp.ne.s32.totalorder %s105, %s121
    %p123 = scmp.eq.s32.totalorder %s16, 0
    %p124 = por %p122, %p123
    %s125 = ssub.s32 %s17, %s36
    %s126 = ssub.s32 %s18, %s32
    %s127 = sor.u32 %s125, %s126
    %p128 = scmp.eq.s32.totalorder %s127, 0
    %s130 = sadd.s32 %s129, 1
    %s131 = scalar_select %p128, %s129, %s130
    %p134 = pneg %p128
    %p135 = scmp.eq.s32.totalorder %s10, 1
    %p136 = por %p134, %p135
    %p137 = scmp.ne.s32.totalorder %s129, %s132
    %p138 = scmp.eq.s32.totalorder %s10, 0
    %p139 = por %p137, %p138
    %p140 = scmp.ne.s32.totalorder %s129, %s132
    %p141 = scmp.eq.s32.totalorder %s15, 1
    %p142 = por %p140, %p141
    %p143 = scmp.ne.s32.totalorder %s132, %s133
    %p144 = scmp.eq.s32.totalorder %s15, 0
    %p145 = por %p143, %p144
    %p146 = scmp.ne.s32.totalorder %s132, %s133
    %p147 = scmp.eq.s32.totalorder %s16, 1
    %p148 = por %p146, %p147
    %p150 = scmp.ne.s32.totalorder %s133, %s149
    %p151 = scmp.eq.s32.totalorder %s16, 0
    %p152 = por %p150, %p151
    %p153 = scmp.le.s32.totalorder 1, %s10
    %p154 = scmp.lt.s32.totalorder %s10, 3
    %p155 = pnand %p153, %p154
    %p156 = pneg %p155
    // Predicated region
    $region9: #{tpu_custom_call.1} parent=5 // pred_check
      _
    $region10: #{tpu_custom_call.1} parent=5 // pred_check_branch
      %158 = sbr.rel (%p155) target = $region12
    $region11: #{tpu_custom_call.1} parent=5 // pred_region
      %s159 = ssub.s32 %s10, 1
    $region12: #{tpu_custom_call.1} parent=5 // pred_fallthru
      _
    %p160 = scmp.lt.s32.totalorder %s10, 2
    // Predicated region
    $region13: #{tpu_custom_call.1} parent=5 // pred_check
      %p161 = pneg %p160
    $region14: #{tpu_custom_call.1} parent=5 // pred_check_branch
      %163 = sbr.rel (%p161) target = $region16
    $region15: #{tpu_custom_call.1} parent=5 // pred_region
      // Predicated region
      $region17: #{tpu_custom_call.1} parent=15 // pred_check
        %p164 = pneg %p53
      $region18: #{tpu_custom_call.1} parent=15 // pred_check_branch
        %166 = sbr.rel (%p164) target = $region20
      $region19: #{tpu_custom_call.1} parent=15 // pred_region
        %s167 = sadd.s32 %s18, %s19
        %s168 = smul.u32 2, %s167
        %p169 = scmp.lt.s32.totalorder %s17, 1
        %s170 = scalar_select %p169, %s17, 1
        %p171 = scmp.lt.s32.totalorder %s168, 1
        %s172 = scalar_select %p171, %s168, 1
        %s173 = smul.addr %s170, 6
        %s174 = sadd.s32 %s172, %s173
        %s175 = smul.addr %s174, 8
        %s176 = scalar_lea.vmem %s0, %s175
        %s177 = sadd.s32 %s18, %s19
        %s178 = smul.u32 2, %s177
      $region20: #{tpu_custom_call.1} parent=15 // pred_fallthru
        _
      // Predicated region
      $region21: #{tpu_custom_call.1} parent=15 // pred_check
        %p179 = pneg %p83
      $region22: #{tpu_custom_call.1} parent=15 // pred_check_branch
        %181 = sbr.rel (%p179) target = $region24
      $region23: #{tpu_custom_call.1} parent=15 // pred_region
        %s182 = sadd.s32 %s18, %s19
        %s183 = smul.u32 2, %s182
        %p184 = scmp.lt.s32.totalorder %s17, 1
        %s185 = scalar_select %p184, %s17, 1
        %p186 = scmp.lt.s32.totalorder %s183, 1
        %s187 = scalar_select %p186, %s183, 1
        %s188 = smul.addr %s185, 2
        %s189 = sadd.s32 %s187, %s188
        %s190 = scalar_lea.vmem %s1, %s189
        %s191 = sadd.s32 %s18, %s19
        %s192 = smul.u32 2, %s191
      $region24: #{tpu_custom_call.1} parent=15 // pred_fallthru
        _
    $region16: #{tpu_custom_call.1} parent=5 // pred_fallthru
      _
    %p193 = scmp.le.s32.totalorder 1, %s10
    %p194 = scmp.lt.s32.totalorder %s10, 3
    %p195 = pnand %p193, %p194
    %p196 = pneg %p195
    // Predicated region
    $region25: #{tpu_custom_call.1} parent=5 // pred_check
      _
    $region26: #{tpu_custom_call.1} parent=5 // pred_check_branch
      %198 = sbr.rel (%p195) target = $region28
    $region27: #{tpu_custom_call.1} parent=5 // pred_region
      %s199 = ssub.s32 %s10, 1
      %s200 = sadd.s32 %s21, %s22
      %s201 = smul.u32 2, %s200
      %p202 = scmp.lt.s32.totalorder %s20, 1
      %s203 = scalar_select %p202, %s20, 1
      %p204 = scmp.lt.s32.totalorder %s201, 1
      %s205 = scalar_select %p204, %s201, 1
      %s206 = smul.addr %s203, 6
      %s207 = sadd.s32 %s205, %s206
      %s208 = smul.addr %s207, 8
      %s209 = scalar_lea.vmem %s0, %s208
      %p210 = pneg %p59
      %p211 = pneg %p56
      %s212 = sadd.s32 %s21, %s22
      %s213 = smul.u32 2, %s212
      %p214 = scmp.lt.s32.totalorder %s20, 1
      %s215 = scalar_select %p214, %s20, 1
      %p216 = scmp.lt.s32.totalorder %s213, 1
      %s217 = scalar_select %p216, %s213, 1
      %s218 = smul.addr %s215, 2
      %s219 = sadd.s32 %s217, %s218
      %s220 = scalar_lea.vmem %s1, %s219
      %p221 = pneg %p89
      %p222 = pneg %p86
      %p223 = pneg %p117
      %p224 = pneg %p114
      %p225 = scmp.lt.s32.totalorder %s20, 1
      %s226 = scalar_select %p225, %s20, 1
      %p227 = scmp.lt.s32.totalorder %s21, 0
      %s228 = scalar_select %p227, %s21, 0
      %s229 = smul.addr %s228, 3
      %s230 = smul.addr %s226, 3
      %s231 = sadd.s32 %s229, %s230
      %s232 = smul.addr %s231, 8
      %s233 = scalar_lea.vmem %s2, %s232
      %p234 = pneg %p145
      %p235 = pneg %p142
      %p236 = scmp.lt.s32.totalorder %s20, 1
      %s237 = scalar_select %p236, %s20, 1
      %p238 = scmp.lt.s32.totalorder %s21, 0
      %s239 = scalar_select %p238, %s21, 0
      %s240 = smul.addr %s239, 3
      %s241 = smul.addr %s237, 3
      %s242 = sadd.s32 %s240, %s241
      %s243 = smul.addr %s242, 8
      %s244 = scalar_lea.vmem %s3, %s243
      %s245 = sadd.s32 %s21, %s22
      %s246 = smul.u32 2, %s245
      %p247 = scmp.lt.s32.totalorder %s20, 1
      %s248 = scalar_select %p247, %s20, 1
      %p249 = scmp.lt.s32.totalorder %s246, 1
      %s250 = scalar_select %p249, %s246, 1
      %s251 = smul.addr %s248, 6
      %s252 = sadd.s32 %s250, %s251
      %s253 = smul.addr %s252, 8
      %s254 = scalar_lea.vmem %s0, %s253
      %s255 = sadd.s32 %s21, %s22
      %s256 = smul.u32 2, %s255
      %s257 = sadd.s32 %s21, %s22
      %s258 = smul.u32 2, %s257
      %p259 = scmp.lt.s32.totalorder %s20, 1
      %s260 = scalar_select %p259, %s20, 1
      %p261 = scmp.lt.s32.totalorder %s258, 1
      %s262 = scalar_select %p261, %s258, 1
      %s263 = smul.addr %s260, 2
      %s264 = sadd.s32 %s262, %s263
      %s265 = scalar_lea.vmem %s1, %s264
      %s266 = sadd.s32 %s21, %s22
      %s267 = smul.u32 2, %s266
      %p268 = scmp.lt.s32.totalorder %s20, 1
      %s269 = scalar_select %p268, %s20, 1
      %p270 = scmp.lt.s32.totalorder %s21, 0
      %s271 = scalar_select %p270, %s21, 0
      %s272 = smul.addr %s271, 3
      %s273 = smul.addr %s269, 3
      %s274 = sadd.s32 %s272, %s273
      %s275 = smul.addr %s274, 8
      %s276 = scalar_lea.vmem %s2, %s275
      %p277 = scmp.lt.s32.totalorder %s20, 1
      %s278 = scalar_select %p277, %s20, 1
      %p279 = scmp.lt.s32.totalorder %s21, 0
      %s280 = scalar_select %p279, %s21, 0
      %s281 = smul.addr %s280, 3
      %s282 = smul.addr %s278, 3
      %s283 = sadd.s32 %s281, %s282
      %s284 = smul.addr %s283, 8
      %s285 = scalar_lea.vmem %s3, %s284
      %p286 = scmp.eq.s32.totalorder %s22, 0
      // Predicated region
      $region29: #{tpu_custom_call.1} parent=27 // pred_check
        %p287 = pneg %p286
      $region30: #{tpu_custom_call.1} parent=27 // pred_check_branch
        %289 = sbr.rel (%p287) target = $region32
      $region31: #{tpu_custom_call.1} parent=27 // pred_region
        %290 = vst [vmem:[%s276] sm:$0xff] 0.0
        %291 = vst [vmem:[%s276 + $0x8] sm:$0xff] 0.0
        %292 = vst [vmem:[%s276 + $0x10] sm:$0x7] 0.0
        %293 = vst [vmem:[%s285] sm:$0xff] 0.0
        %294 = vst [vmem:[%s285 + $0x8] sm:$0xff] 0.0
        %295 = vst [vmem:[%s285 + $0x10] sm:$0x7] 0.0
      $region32: #{tpu_custom_call.1} parent=27 // pred_fallthru
        _
      %v296 = vld [vmem:[%s254] sm:$0xff]
      %v297 = vld [vmem:[%s254 + $0x8] sm:$0xff]
      %v298 = vld [vmem:[%s254 + $0x10] sm:$0xff]
      %v299 = vld [vmem:[%s254 + $0x18] sm:$0xff]
      %v300 = vld [vmem:[%s254 + $0x20] sm:$0x7]
      %v301 = vld [vmem:[%s254 + $0x28] sm:$0x7]
      %v302 = vld [vmem:[%s265] sm:$0x3]
      %vm303 = vcmask 1042432
      %v304 = vsel %vm303, %v300, -inf
      %v305 = vmax.f32 %v296, %v304
      %v306 = vmax.f32 %v305, %v298
      %v307 = vrot.slane %v306, 4
      %v308 = vmax.f32 %v306, %v307
      %v309 = vrot.slane %v308, 2
      %v310 = vmax.f32 %v308, %v309
      %v311 = vrot.slane %v310, 1
      %v312 = vmax.f32 %v310, %v311
      %v313 = vsel %vm303, %v301, -inf
      %v314 = vmax.f32 %v297, %v313
      %v315 = vmax.f32 %v314, %v299
      %v316 = vrot.slane %v315, 4
      %v317 = vmax.f32 %v315, %v316
      %v318 = vrot.slane %v317, 2
      %v319 = vmax.f32 %v317, %v318
      %v320 = vrot.slane %v319, 1
      %v321 = vmax.f32 %v319, %v320
      %v322 = vsub.f32 %v296, %v312
      %v323 = vsub.f32 %v297, %v321
      %v324 = vsub.f32 %v298, %v312
      %v325 = vsub.f32 %v299, %v321
      %v326 = vsub.f32 %v300, %v312
      %v327 = vsub.f32 %v301, %v321
      %v328 = vmul.f32 %v322, 1.442695
      %v329 = vpow.pop %v328
      %v330 = vmul.f32 %v323, 1.442695
      %v331 = vpow.pop %v330
      %v332 = vmul.f32 %v324, 1.442695
      %v333 = vpow.pop %v332
      %v334 = vmul.f32 %v325, 1.442695
      %v335 = vpow.pop %v334
      %v336 = vmul.f32 %v326, 1.442695
      %v337 = vpow.pop %v336
      %v338 = vmul.f32 %v327, 1.442695
      %v339 = vpow.pop %v338
      %v340 = vadd.f32 %v329, %v333
      %v341 = vsel %vm303, %v337, 0.0
      %v342 = vadd.f32 %v340, %v341
      %v343 = vrot.slane %v342, 4
      %v344 = vadd.f32 %v342, %v343
      %v345 = vrot.slane %v344, 2
      %v346 = vadd.f32 %v344, %v345
      %v347 = vrot.slane %v346, 1
      %v348 = vadd.f32 %v346, %v347
      %v349 = vadd.f32 %v331, %v335
      %v350 = vsel %vm303, %v339, 0.0
      %v351 = vadd.f32 %v349, %v350
      %v352 = vrot.slane %v351, 4
      %v353 = vadd.f32 %v351, %v352
      %v354 = vrot.slane %v353, 2
      %v355 = vadd.f32 %v353, %v354
      %v356 = vrot.slane %v355, 1
      %v357 = vadd.f32 %v355, %v356
      %v358 = vlog2.pop %v348
      %v359 = vmul.f32 %v358, 0.6931472
      %v360 = vlog2.pop %v357
      %v361 = vmul.f32 %v360, 0.6931472
      %v362 = vadd.f32 %v312, %v359
      %v363 = vadd.f32 %v321, %v361
      %v364 = vlaneseq
      %v365 = vshrl.u32 %v364, 7
      %v366 = vadd.s32 %v365, 8
      %v367 = vadd.s32 %v365, 16
      %v368 = vlaneseq
      %v369 = vshrl.u32 %v368, 7
      %v370 = vsub.s32 0, %v369
      %v371 = vrot.slane %v302, %v370
      %v372 = vlaneseq
      %v373 = vshrl.u32 %v372, 7
      %v374 = vsub.s32 1, %v373
      %v375 = vrot.slane %v302, %v374
      %vm376 = vcmp.eq.s32.totalorder %v365, %v371
      %vm377 = vcmp.eq.s32.totalorder %v365, %v375
      %vm378 = vcmp.eq.s32.totalorder %v366, %v371
      %vm379 = vcmp.eq.s32.totalorder %v366, %v375
      %vm380 = vcmp.eq.s32.totalorder %v367, %v371
      %vm381 = vcmp.eq.s32.totalorder %v367, %v375
      %v382 = vsub.f32 %v362, %v296
      %v383 = vsub.f32 %v363, %v297
      %v384 = vsub.f32 %v362, %v298
      %v385 = vsub.f32 %v363, %v299
      %v386 = vsub.f32 %v362, %v300
      %v387 = vsub.f32 %v363, %v301
      %v388 = vsel %vm376, %v382, 0.0
      %v389 = vsel %vm377, %v383, 0.0
      %v390 = vsel %vm378, %v384, 0.0
      %v391 = vsel %vm379, %v385, 0.0
      %v392 = vsel %vm380, %v386, 0.0
      %v393 = vsel %vm381, %v387, 0.0
      %v394 = vsel %vm376, 1.0, 0.0
      %v395 = vsel %vm377, 1.0, 0.0
      %v396 = vsel %vm378, 1.0, 0.0
      %v397 = vsel %vm379, 1.0, 0.0
      %v398 = vsel %vm380, 1.0, 0.0
      %v399 = vsel %vm381, 1.0, 0.0
      %v400 = vadd.f32 %v388, 0.0
      %v401 = vadd.f32 %v390, 0.0
      %v402 = vadd.f32 %v392, 0.0
      %v403 = vadd.f32 %v394, 0.0
      %v404 = vadd.f32 %v396, 0.0
      %v405 = vadd.f32 %v398, 0.0
      %v406 = vadd.f32 %v400, %v389
      %v407 = vadd.f32 %v401, %v391
      %v408 = vadd.f32 %v402, %v393
      %v409 = vadd.f32 %v403, %v395
      %v410 = vadd.f32 %v404, %v397
      %v411 = vadd.f32 %v405, %v399
      %v412 = vld [vmem:[%s276] sm:$0xff]
      %v413 = vld [vmem:[%s276 + $0x8] sm:$0xff]
      %v414 = vld [vmem:[%s276 + $0x10] sm:$0x7]
      %v415 = vadd.f32 %v412, %v406
      %v416 = vadd.f32 %v413, %v407
      %v417 = vadd.f32 %v414, %v408
      %418 = vst [vmem:[%s276] sm:$0xff] %v415
      %419 = vst [vmem:[%s276 + $0x8] sm:$0xff] %v416
      %420 = vst [vmem:[%s276 + $0x10] sm:$0x7] %v417
      %v421 = vld [vmem:[%s285] sm:$0xff]
      %v422 = vld [vmem:[%s285 + $0x8] sm:$0xff]
      %v423 = vld [vmem:[%s285 + $0x10] sm:$0x7]
      %v424 = vadd.f32 %v421, %v409
      %v425 = vadd.f32 %v422, %v410
      %v426 = vadd.f32 %v423, %v411
      %427 = vst [vmem:[%s285] sm:$0xff] %v424
      %428 = vst [vmem:[%s285 + $0x8] sm:$0xff] %v425
      %429 = vst [vmem:[%s285 + $0x10] sm:$0x7] %v426
      %p430 = scmp.lt.s32.totalorder %s20, 1
      %s431 = scalar_select %p430, %s20, 1
      %p432 = scmp.lt.s32.totalorder %s21, 0
      %s433 = scalar_select %p432, %s21, 0
      %s434 = smul.addr %s433, 3
      %s435 = smul.addr %s431, 3
      %s436 = sadd.s32 %s434, %s435
      %s437 = smul.addr %s436, 8
      %s438 = scalar_lea.vmem %s2, %s437
      %p439 = scmp.lt.s32.totalorder %s20, 1
      %s440 = scalar_select %p439, %s20, 1
      %p441 = scmp.lt.s32.totalorder %s21, 0
      %s442 = scalar_select %p441, %s21, 0
      %s443 = smul.addr %s442, 3
      %s444 = smul.addr %s440, 3
      %s445 = sadd.s32 %s443, %s444
      %s446 = smul.addr %s445, 8
      %s447 = scalar_lea.vmem %s3, %s446
      // Predicated region
      $region33: #{tpu_custom_call.1} parent=27 // pred_check
        %p448 = pneg %p114
      $region34: #{tpu_custom_call.1} parent=27 // pred_check_branch
        %450 = sbr.rel (%p448) target = $region36
      $region35: #{tpu_custom_call.1} parent=27 // pred_region
        _
      $region36: #{tpu_custom_call.1} parent=27 // pred_fallthru
        _
      // Predicated region
      $region37: #{tpu_custom_call.1} parent=27 // pred_check
        %p451 = pneg %p142
      $region38: #{tpu_custom_call.1} parent=27 // pred_check_branch
        %453 = sbr.rel (%p451) target = $region40
      $region39: #{tpu_custom_call.1} parent=27 // pred_region
        _
      $region40: #{tpu_custom_call.1} parent=27 // pred_fallthru
        _
    $region28: #{tpu_custom_call.1} parent=5 // pred_fallthru
      _
    %p454 = scmp.le.s32.totalorder 2, %s10
    // Predicated region
    $region41: #{tpu_custom_call.1} parent=5 // pred_check
      %p455 = pneg %p454
    $region42: #{tpu_custom_call.1} parent=5 // pred_check_branch
      %457 = sbr.rel (%p455) target = $region44
    $region43: #{tpu_custom_call.1} parent=5 // pred_region
      %s458 = ssub.s32 %s10, 2
      // Predicated region
      $region45: #{tpu_custom_call.1} parent=43 // pred_check
        %p459 = pneg %p120
      $region46: #{tpu_custom_call.1} parent=43 // pred_check_branch
        %461 = sbr.rel (%p459) target = $region48
      $region47: #{tpu_custom_call.1} parent=43 // pred_region
        %p462 = scmp.lt.s32.totalorder %s23, 1
        %s463 = scalar_select %p462, %s23, 1
        %p464 = scmp.lt.s32.totalorder %s24, 0
        %s465 = scalar_select %p464, %s24, 0
        %s466 = smul.addr %s465, 3
        %s467 = smul.addr %s463, 3
        %s468 = sadd.s32 %s466, %s467
        %s469 = smul.addr %s468, 8
        %s470 = scalar_lea.vmem %s2, %s469
      $region48: #{tpu_custom_call.1} parent=43 // pred_fallthru
        _
      // Predicated region
      $region49: #{tpu_custom_call.1} parent=43 // pred_check
        %p471 = pneg %p148
      $region50: #{tpu_custom_call.1} parent=43 // pred_check_branch
        %473 = sbr.rel (%p471) target = $region52
      $region51: #{tpu_custom_call.1} parent=43 // pred_region
        %p474 = scmp.lt.s32.totalorder %s23, 1
        %s475 = scalar_select %p474, %s23, 1
        %p476 = scmp.lt.s32.totalorder %s24, 0
        %s477 = scalar_select %p476, %s24, 0
        %s478 = smul.addr %s477, 3
        %s479 = smul.addr %s475, 3
        %s480 = sadd.s32 %s478, %s479
        %s481 = smul.addr %s480, 8
        %s482 = scalar_lea.vmem %s3, %s481
      $region52: #{tpu_custom_call.1} parent=43 // pred_fallthru
        _
    $region44: #{tpu_custom_call.1} parent=5 // pred_fallthru
      _
  $region6: #{tpu_custom_call.1} parent=0 // loop_footer
    %s14 = sadd.s32 1, %s10
  $region7: #{tpu_custom_call.1} parent=0 // loop_footer_branch
    %9 = sbr.rel target = $region3
  $region8: #{tpu_custom_call.1} parent=0 // loop_exit
    _

</llo_original>
